<compile_context>
chip_gen: v6e
topology: v6e:2x2x1
jax: 0.10.0
libtpu: 0.0.40
codegen_flags: <defaults>
</compile_context>

<pallas_src>
import jax
import jax.numpy as jnp
from jax.experimental import pallas as pl
from jax.experimental.pallas import tpu as pltpu


def _round_up(x: int, m: int) -> int:
    return ((x + m - 1) // m) * m


def _qnetwork_kernel(x_ref, w1_ref, b1_ref, w2_ref, b2_ref, out_ref):
    # fc1: (TB, in) @ (in, hid) on the MXU (bf16 operands, f32 accumulate),
    # bias add + ReLU in f32 on the VPU.
    h = jnp.dot(x_ref[...], w1_ref[...], preferred_element_type=jnp.float32)
    h = jnp.maximum(h + b1_ref[...], 0.0)
    # fc2: cast hidden back to the weight dtype for the MXU, accumulate f32.
    y = jnp.dot(h.astype(w2_ref.dtype), w2_ref[...],
                preferred_element_type=jnp.float32)
    out_ref[...] = (y + b2_ref[...]).astype(out_ref.dtype)


def pack_qnetwork_params(w1, b1, w2, b2, compute_dtype=jnp.bfloat16):
    """One-time parameter packing (do at init / target-net update, not per step):
    weights -> MXU compute dtype, biases -> f32 row vectors."""
    return (w1.astype(compute_dtype),
            b1.astype(jnp.float32).reshape(1, -1),
            w2.astype(compute_dtype),
            b2.astype(jnp.float32).reshape(1, -1))


def qnetwork_forward(x, w1, b1, w2, b2):
    """Fused fc1 -> ReLU -> fc2.

    x:  (B, in)              (any float dtype; cast to bf16 for the MXU)
    w1: (in, hidden)         (transposed vs. PyTorch nn.Linear.weight)
    b1: (hidden,) or (1, hidden)
    w2: (hidden, out)
    b2: (out,) or (1, out)
    Returns (B, out) in x.dtype.
    """
    B, in_size = x.shape
    hid_size = w1.shape[1]
    out_size = w2.shape[1]

    compute_dtype = jnp.bfloat16
    x_c = x.astype(compute_dtype)                 # no-op if already bf16
    w1_c = w1.astype(compute_dtype)
    w2_c = w2.astype(compute_dtype)
    b1_r = b1.astype(jnp.float32).reshape(1, hid_size)
    b2_r = b2.astype(jnp.float32).reshape(1, out_size)

    # ---- batch tiling: minimise last-tile waste; >=2 tiles at larger batches
    # so the "parallel" grid axis can shard across both v7x TensorCores. ------
    max_tile = 512
    min_tiles = 2 if B >= 256 else 1
    n_tiles = max(min_tiles, pl.cdiv(B, max_tile))
    tile_b = min(_round_up(pl.cdiv(B, n_tiles), 8), _round_up(B, 8))
    b_pad = _round_up(B, tile_b)
    grid = (b_pad // tile_b,)

    if b_pad != B:
        # small batch-only pad (<= 7 rows of waste after tile rounding)
        x_c = jnp.pad(x_c, ((0, b_pad - B), (0, 0)))

    out_dtype = x.dtype
    in_bytes = jnp.dtype(compute_dtype).itemsize
    out_bytes = jnp.dtype(out_dtype).itemsize

    # Actual VMEM footprint: double-buffered x/out tiles + resident weights /
    # biases + the f32 hidden intermediate.  Request ~2x, small floor only.
    vmem_bytes = (
        2 * tile_b * in_size * in_bytes
        + 2 * tile_b * out_size * out_bytes
        + (in_size * hid_size + hid_size * out_size) * in_bytes
        + (hid_size + out_size) * 4
        + tile_b * hid_size * 4
    )
    vmem_limit = int(min(32 << 20, max(2 * vmem_bytes, 4 << 20)))

    cost = pl.CostEstimate(
        flops=2 * b_pad * (in_size * hid_size + hid_size * out_size),
        transcendentals=0,
        bytes_accessed=(
            in_bytes * (b_pad * in_size + in_size * hid_size + hid_size * out_size)
            + 4 * (hid_size + out_size)
            + out_bytes * b_pad * out_size
        ),
    )

    out_padded = pl.pallas_call(
        _qnetwork_kernel,
        out_shape=jax.ShapeDtypeStruct((b_pad, out_size), out_dtype),
        grid=grid,
        in_specs=[
            pl.BlockSpec((tile_b, in_size), lambda i: (i, 0)),     # x: batch-tiled
            pl.BlockSpec((in_size, hid_size), lambda i: (0, 0)),   # W1: resident
            pl.BlockSpec((1, hid_size), lambda i: (0, 0)),         # b1: resident
            pl.BlockSpec((hid_size, out_size), lambda i: (0, 0)),  # W2: resident
            pl.BlockSpec((1, out_size), lambda i: (0, 0)),         # b2: resident
        ],
        out_specs=pl.BlockSpec((tile_b, out_size), lambda i: (i, 0)),
        compiler_params=pltpu.CompilerParams(
            dimension_semantics=("parallel",),   # shards batch tiles on v7x
            vmem_limit_bytes=vmem_limit,
        ),
        cost_estimate=cost,
    )(x_c, w1_c, b1_r, w2_c, b2_r)

    if b_pad != B:
        out_padded = out_padded[:B]
    return out_padded


def init_qnetwork_params(key, input_size, hidden_size, output_size):
    """Deterministic init mimicking nn.Linear default: U(-1/sqrt(fan_in), 1/sqrt(fan_in))."""
    k1, k2, k3, k4 = jax.random.split(key, 4)
    bound1 = 1.0 / jnp.sqrt(jnp.float32(input_size))
    bound2 = 1.0 / jnp.sqrt(jnp.float32(hidden_size))
    w1 = jax.random.uniform(k1, (input_size, hidden_size), jnp.float32, -bound1, bound1)
    b1 = jax.random.uniform(k2, (hidden_size,), jnp.float32, -bound1, bound1)
    w2 = jax.random.uniform(k3, (hidden_size, output_size), jnp.float32, -bound2, bound2)
    b2 = jax.random.uniform(k4, (output_size,), jnp.float32, -bound2, bound2)
    return w1, b1, w2, b2


if __name__ == "__main__":
    # DQN-style Q-network: state dim 16, hidden 32, 4 actions, small batch.
    batch, input_size, hidden_size, output_size = 8, 16, 32, 4

    key = jax.random.PRNGKey(0)
    kx, kp, kx2 = jax.random.split(key, 3)
    x = jax.random.normal(kx, (batch, input_size), jnp.float32)
    w1, b1, w2, b2 = init_qnetwork_params(kp, input_size, hidden_size, output_size)

    # Pack parameters ONCE (bf16 weights, f32 row-vector biases).
    pw1, pb1, pw2, pb2 = pack_qnetwork_params(w1, b1, w2, b2)

    out = jax.block_until_ready(qnetwork_forward(x, pw1, pb1, pw2, pb2))

    # Pure-JAX reference of the same math (bf16 operands, f32 accumulate).
    def ref_forward(xx):
        xb = xx.astype(jnp.bfloat16).astype(jnp.float32)
        w1f = pw1.astype(jnp.float32)
        w2f = pw2.astype(jnp.float32)
        h = jnp.maximum(xb @ w1f + b1, 0.0)
        return h.astype(jnp.bfloat16).astype(jnp.float32) @ w2f + b2

    ref = ref_forward(x)
    assert out.shape == (batch, output_size)
    assert jnp.allclose(out, ref, atol=1e-2, rtol=1e-2), float(jnp.max(jnp.abs(out - ref)))

    # Multi-tile path (grid of 2 batch tiles; exercises both-TC sharding on v7x).
    x_big = jax.random.normal(kx2, (1024, input_size), jnp.float32)
    out_big = jax.block_until_ready(qnetwork_forward(x_big, pw1, pb1, pw2, pb2))
    ref_big = ref_forward(x_big)
    assert out_big.shape == (1024, output_size)
    assert jnp.allclose(out_big, ref_big, atol=1e-2, rtol=1e-2), \
        float(jnp.max(jnp.abs(out_big - ref_big)))

    print("KERNEL_OK")
</pallas_src>

<mosaic_0001>
module attributes {stable_mosaic.version = 11 : i64} {
  func.func @_qnetwork_kernel(%arg0: i32, %arg1: memref<8x16xbf16, #tpu.memory_space<vmem>>, %arg2: memref<16x32xbf16, #tpu.memory_space<vmem>>, %arg3: memref<1x32xf32, #tpu.memory_space<vmem>>, %arg4: memref<32x4xbf16, #tpu.memory_space<vmem>>, %arg5: memref<1x4xf32, #tpu.memory_space<vmem>>, %arg6: memref<8x4xf32, #tpu.memory_space<vmem>>) attributes {dimension_semantics = [#tpu.dimension_semantics<parallel>], iteration_bounds = array<i64: 1>, scalar_prefetch = 0 : i64, scratch_operands = 0 : i64, tpu.core_type = #tpu.core_type<tc>, window_params = [{transform_indices = @transform_0, window_bounds = array<i64: 8, 16>}, {pipeline_mode = #tpu.pipeline_mode<synchronous>, transform_indices = @transform_1, window_bounds = array<i64: 16, 32>}, {pipeline_mode = #tpu.pipeline_mode<synchronous>, transform_indices = @transform_2, window_bounds = array<i64: 1, 32>}, {pipeline_mode = #tpu.pipeline_mode<synchronous>, transform_indices = @transform_3, window_bounds = array<i64: 32, 4>}, {pipeline_mode = #tpu.pipeline_mode<synchronous>, transform_indices = @transform_4, window_bounds = array<i64: 1, 4>}, {transform_indices = @transform_5, window_bounds = array<i64: 8, 4>}]} {
    %c0 = arith.constant 0 : index
    %c0_0 = arith.constant 0 : index
    %0 = vector.load %arg1[%c0, %c0_0] : memref<8x16xbf16, #tpu.memory_space<vmem>>, vector<8x16xbf16>
    %c0_1 = arith.constant 0 : index
    %c0_2 = arith.constant 0 : index
    %1 = vector.load %arg2[%c0_1, %c0_2] : memref<16x32xbf16, #tpu.memory_space<vmem>>, vector<16x32xbf16>
    %cst = arith.constant dense<0.000000e+00> : vector<8x32xf32>
    %2 = tpu.matmul %0, %1, %cst {dimension_numbers = #tpu.dot_dimension_numbers<[1], [0], [0], [1], [0, 0, 1, 1], [], []>} : vector<8x16xbf16>, vector<16x32xbf16>, vector<8x32xf32> -> vector<8x32xf32>
    %c0_3 = arith.constant 0 : index
    %c0_4 = arith.constant 0 : index
    %3 = vector.load %arg3[%c0_3, %c0_4] : memref<1x32xf32, #tpu.memory_space<vmem>>, vector<1x32xf32>
    %4 = vector.broadcast %3 : vector<1x32xf32> to vector<8x32xf32>
    %5 = arith.addf %2, %4 : vector<8x32xf32>
    %cst_5 = arith.constant 0.000000e+00 : f32
    %6 = vector.broadcast %cst_5 : f32 to vector<8x32xf32>
    %7 = arith.maximumf %5, %6 : vector<8x32xf32>
    %8 = arith.truncf %7 : vector<8x32xf32> to vector<8x32xbf16>
    %c0_6 = arith.constant 0 : index
    %c0_7 = arith.constant 0 : index
    %9 = vector.load %arg4[%c0_6, %c0_7] : memref<32x4xbf16, #tpu.memory_space<vmem>>, vector<32x4xbf16>
    %cst_8 = arith.constant dense<0.000000e+00> : vector<8x4xf32>
    %10 = tpu.matmul %8, %9, %cst_8 {dimension_numbers = #tpu.dot_dimension_numbers<[1], [0], [0], [1], [0, 0, 1, 1], [], []>} : vector<8x32xbf16>, vector<32x4xbf16>, vector<8x4xf32> -> vector<8x4xf32>
    %c0_9 = arith.constant 0 : index
    %c0_10 = arith.constant 0 : index
    %11 = vector.load %arg5[%c0_9, %c0_10] : memref<1x4xf32, #tpu.memory_space<vmem>>, vector<1x4xf32>
    %12 = vector.broadcast %11 : vector<1x4xf32> to vector<8x4xf32>
    %13 = arith.addf %10, %12 : vector<8x4xf32>
    %c0_11 = arith.constant 0 : index
    %c0_12 = arith.constant 0 : index
    %14 = vector.load %arg6[%c0_11, %c0_12] : memref<8x4xf32, #tpu.memory_space<vmem>>, vector<8x4xf32>
    tpu.vector_store %arg6[%c0_11, %c0_12], %13 {strides = array<i32>} : memref<8x4xf32, #tpu.memory_space<vmem>>, vector<8x4xf32>,
    return
  }
  func.func @transform_0(%arg0: i32) -> (i32, i32) {
    %c0_i32 = arith.constant 0 : i32
    %c0_i32_0 = arith.constant 0 : i32
    return %arg0, %c0_i32 : i32, i32
  }
  func.func @transform_1(%arg0: i32) -> (i32, i32) {
    %c0_i32 = arith.constant 0 : i32
    %c0_i32_0 = arith.constant 0 : i32
    %c0_i32_1 = arith.constant 0 : i32
    return %c0_i32, %c0_i32_0 : i32, i32
  }
  func.func @transform_2(%arg0: i32) -> (i32, i32) {
    %c0_i32 = arith.constant 0 : i32
    %c0_i32_0 = arith.constant 0 : i32
    %c0_i32_1 = arith.constant 0 : i32
    return %c0_i32, %c0_i32_0 : i32, i32
  }
  func.func @transform_3(%arg0: i32) -> (i32, i32) {
    %c0_i32 = arith.constant 0 : i32
    %c0_i32_0 = arith.constant 0 : i32
    %c0_i32_1 = arith.constant 0 : i32
    return %c0_i32, %c0_i32_0 : i32, i32
  }
  func.func @transform_4(%arg0: i32) -> (i32, i32) {
    %c0_i32 = arith.constant 0 : i32
    %c0_i32_0 = arith.constant 0 : i32
    %c0_i32_1 = arith.constant 0 : i32
    return %c0_i32, %c0_i32_0 : i32, i32
  }
  func.func @transform_5(%arg0: i32) -> (i32, i32) {
    %c0_i32 = arith.constant 0 : i32
    %c0_i32_0 = arith.constant 0 : i32
    return %arg0, %c0_i32 : i32, i32
  }
}

</mosaic_0001>

<llo_original>
// kernel: tpu_custom_call.1
$region0: #{tpu_custom_call.1}
  #allocation0 [shape = 'u32[]', space=smem, size = 0x4, offset = 0x4, fixed_abs, tag = 'smem constant byte address 0x4 - core index']
  #allocation1 [shape = 'u32[144,128]{1,0:T(1,128)}', space=vmem, size = 0x12000, scoped, tag = 'internal scratch']
  %s0 = inlined_call_operand.vmem [shape: bf16[8,16], index: 0, kind: input, shape index: {}]
  %s1 = inlined_call_operand.vmem [shape: bf16[16,32], index: 1, kind: input, shape index: {}]
  %s2 = inlined_call_operand.vmem [shape: f32[1,32], index: 2, kind: input, shape index: {}]
  %s3 = inlined_call_operand.vmem [shape: bf16[32,4], index: 3, kind: input, shape index: {}]
  %s4 = inlined_call_operand.vmem [shape: f32[1,4], index: 4, kind: input, shape index: {}]
  %s5 = inlined_call_operand.vmem [shape: f32[8,4], index: 5, kind: output, shape index: {}]
  %s6 = sld [smem:[#allocation0]]
  $region30: #{tpu_custom_call.1} parent=0
    _
  %s8 = ssub.s32 1, %s6
  %s9 = scalar_select 0, %s8, %s6
  // Predicated region
  $region2: #{tpu_custom_call.1} parent=0 // pred_check
    _
  $region3: #{tpu_custom_call.1} parent=0 // pred_check_branch
    %11 = sbr.rel (0) target = $region5
  $region4: #{tpu_custom_call.1} parent=0 // pred_region
    _
  $region5: #{tpu_custom_call.1} parent=0 // pred_fallthru
    _
  // Predicated region
  $region6: #{tpu_custom_call.1} parent=0 // pred_check
    _
  $region7: #{tpu_custom_call.1} parent=0 // pred_check_branch
    %13 = sbr.rel (0) target = $region9
  $region8: #{tpu_custom_call.1} parent=0 // pred_region
    _
  $region9: #{tpu_custom_call.1} parent=0 // pred_fallthru
    _
  // Predicated region
  $region10: #{tpu_custom_call.1} parent=0 // pred_check
    _
  $region11: #{tpu_custom_call.1} parent=0 // pred_check_branch
    %15 = sbr.rel (0) target = $region13
  $region12: #{tpu_custom_call.1} parent=0 // pred_region
    _
  $region13: #{tpu_custom_call.1} parent=0 // pred_fallthru
    _
  // Predicated region
  $region14: #{tpu_custom_call.1} parent=0 // pred_check
    _
  $region15: #{tpu_custom_call.1} parent=0 // pred_check_branch
    %17 = sbr.rel (0) target = $region17
  $region16: #{tpu_custom_call.1} parent=0 // pred_region
    _
  $region17: #{tpu_custom_call.1} parent=0 // pred_fallthru
    _
  // Predicated region
  $region18: #{tpu_custom_call.1} parent=0 // pred_check
    _
  $region19: #{tpu_custom_call.1} parent=0 // pred_check_branch
    %19 = sbr.rel (0) target = $region21
  $region20: #{tpu_custom_call.1} parent=0 // pred_region
    _
  $region21: #{tpu_custom_call.1} parent=0 // pred_fallthru
    _
  %v21 = vld [vmem:[%s0] sm:$0xf]
  %v22 = vld [vmem:[%s1] sm:$0xf]
  %v23 = vld [vmem:[%s1 + $0x4] sm:$0xf]
  %v24 = vld [vmem:[%s2] sm:$0x1]
  %v26 = vlaneseq
  %v27 = vshrl.u32 %v26, 7
  %v28 = vsub.s32 0, %v27
  %v29 = vrot.slane %v24, %v28
  %v33 = vunpack.c.l.b16 %v22
  %v34 = vunpack.c.l.b16 %v23
  %v35 = vpack.c.b16 %v34, %v33
  %vm37 = vcmask 130048
  %v39 = vsel %vm37, %v21, 0
  %41 = vmatprep.subr.bf16.mxu0 0
  %42 = vmatpush1.bf16.msra.mxu0 0
  %43 = vmatprep.subr.bf16.mxu0 0
  %44 = vmatpush1.bf16.msra.mxu0 0
  %45 = vmatprep.subr.bf16.mxu0 0
  %46 = vmatpush1.bf16.msra.mxu0 0
  %47 = vmatprep.subr.bf16.mxu0 0
  %48 = vmatpush1.bf16.msra.mxu0 0
  %49 = vmatprep.subr.bf16.mxu0 0
  %50 = vmatpush1.bf16.msra.mxu0 0
  %51 = vmatprep.subr.bf16.mxu0 0
  %52 = vmatpush1.bf16.msra.mxu0 0
  %53 = vmatprep.subr.bf16.mxu0 0
  %54 = vmatpush1.bf16.msra.mxu0 0
  %55 = vmatprep.subr.bf16.mxu0 0
  %56 = vmatpush1.bf16.msra.mxu0 %v35
  %57 = vmatprep.subr.bf16.mxu0 0
  %58 = vmatpush2.bf16.msra.mxu0 0
  %59 = vmatprep.subr.bf16.mxu0 0
  %60 = vmatpush2.bf16.msra.mxu0 0
  %61 = vmatprep.subr.bf16.mxu0 0
  %62 = vmatpush2.bf16.msra.mxu0 0
  %63 = vmatprep.subr.bf16.mxu0 0
  %64 = vmatpush2.bf16.msra.mxu0 0
  %65 = vmatprep.subr.bf16.mxu0 0
  %66 = vmatpush2.bf16.msra.mxu0 0
  %67 = vmatprep.subr.bf16.mxu0 0
  %68 = vmatpush2.bf16.msra.mxu0 0
  %69 = vmatprep.subr.bf16.mxu0 0
  %70 = vmatpush2.bf16.msra.mxu0 0
  %71 = vmatprep.subr.bf16.mxu0 0
  %72 = vmatpush2.bf16.msra.mxu0 0
  %73 = vmatprep.mubr.bf16.mxu0 0
  %74 = vmatmul.mubr.bf16.gmra.mxu0 %v39
  %v75 = vpop.f32.mrf.mxu0
  %v76 = vadd.f32 %v29, %v75
  %v77 = vpop.f32.mrf.mxu0
  %v78 = vpop.f32.mrf.mxu0
  %v79 = vpop.f32.mrf.mxu0
  %80 = vdwg.mxu0
  %v81 = vmax.f32 %v76, 0.0
  %v82 = vpack.c.bf16 %v81, %v81
  %v83 = vld [vmem:[%s3] sm:$0xf]
  %v84 = vld [vmem:[%s3 + $0x4] sm:$0xf]
  %v85 = vld [vmem:[%s3 + $0x8] sm:$0xf]
  %v86 = vld [vmem:[%s3 + $0xc] sm:$0xf]
  %v87 = vld [vmem:[%s4] sm:$0x1]
  %v89 = vlaneseq
  %v90 = vshrl.u32 %v89, 7
  %v91 = vsub.s32 0, %v90
  %v92 = vrot.slane %v87, %v91
  %v98 = vunpack.c.l.b16 %v83
  %v99 = vunpack.c.l.b16 %v84
  %v100 = vunpack.c.l.b16 %v85
  %v101 = vunpack.c.l.b16 %v86
  %v102 = vpack.c.b16 %v99, %v98
  %v103 = vpack.c.b16 %v101, %v100
  %vm106 = vcmask 261120
  %v108 = vsel %vm106, %v82, 0
  %110 = vmatprep.subr.bf16.mxu0 0
  %111 = vmatpush1.bf16.msra.mxu0 0
  %112 = vmatprep.subr.bf16.mxu0 0
  %113 = vmatpush1.bf16.msra.mxu0 0
  %114 = vmatprep.subr.bf16.mxu0 0
  %115 = vmatpush1.bf16.msra.mxu0 0
  %116 = vmatprep.subr.bf16.mxu0 0
  %117 = vmatpush1.bf16.msra.mxu0 0
  %118 = vmatprep.subr.bf16.mxu0 0
  %119 = vmatpush1.bf16.msra.mxu0 0
  %120 = vmatprep.subr.bf16.mxu0 0
  %121 = vmatpush1.bf16.msra.mxu0 0
  %122 = vmatprep.subr.bf16.mxu0 0
  %123 = vmatpush1.bf16.msra.mxu0 %v103
  %124 = vmatprep.subr.bf16.mxu0 0
  %125 = vmatpush1.bf16.msra.mxu0 %v102
  %126 = vmatprep.subr.bf16.mxu0 0
  %127 = vmatpush2.bf16.msra.mxu0 0
  %128 = vmatprep.subr.bf16.mxu0 0
  %129 = vmatpush2.bf16.msra.mxu0 0
  %130 = vmatprep.subr.bf16.mxu0 0
  %131 = vmatpush2.bf16.msra.mxu0 0
  %132 = vmatprep.subr.bf16.mxu0 0
  %133 = vmatpush2.bf16.msra.mxu0 0
  %134 = vmatprep.subr.bf16.mxu0 0
  %135 = vmatpush2.bf16.msra.mxu0 0
  %136 = vmatprep.subr.bf16.mxu0 0
  %137 = vmatpush2.bf16.msra.mxu0 0
  %138 = vmatprep.subr.bf16.mxu0 0
  %139 = vmatpush2.bf16.msra.mxu0 0
  %140 = vmatprep.subr.bf16.mxu0 0
  %141 = vmatpush2.bf16.msra.mxu0 0
  %142 = vmatprep.mubr.bf16.mxu0 0
  %143 = vmatmul.mubr.bf16.gmra.mxu0 %v108
  %v144 = vpop.f32.mrf.mxu0
  %v145 = vadd.f32 %v92, %v144
  %v146 = vpop.f32.mrf.mxu0
  %v147 = vpop.f32.mrf.mxu0
  %v148 = vpop.f32.mrf.mxu0
  %149 = vdwg.mxu0
  %vm150 = vcmask 31744
  %151 = vst.msk [vmem:[%s5] sm:$0xff] %vm150, %v145
  // Predicated region
  $region22: #{tpu_custom_call.1} parent=0 // pred_check
    _
  $region23: #{tpu_custom_call.1} parent=0 // pred_check_branch
    %153 = sbr.rel (0) target = $region25
  $region24: #{tpu_custom_call.1} parent=0 // pred_region
    _
  $region25: #{tpu_custom_call.1} parent=0 // pred_fallthru
    _
  // Predicated region
  $region26: #{tpu_custom_call.1} parent=0 // pred_check
    _
  $region27: #{tpu_custom_call.1} parent=0 // pred_check_branch
    %155 = sbr.rel (0) target = $region29
  $region28: #{tpu_custom_call.1} parent=0 // pred_region
    _
  $region29: #{tpu_custom_call.1} parent=0 // pred_fallthru
    _

</llo_original>
